<compile_context>
chip_gen: v7x
topology: tpu7x:2x2x1
jax: 0.10.0
libtpu: 0.0.40
codegen_flags: <defaults>
</compile_context>

<pallas_src>
import functools
import math

import numpy as np

import jax
import jax.numpy as jnp
from jax import lax
from jax.experimental import pallas as pl
from jax.experimental.pallas import tpu as pltpu

LEAKY_SLOPE = 0.01  # F.leaky_relu default negative_slope
LANE = 128
SUBLANE = 8


def _round_up(x, m):
    return ((x + m - 1) // m) * m


# --------------------------------------------------------------------------- #
# Kernel
# --------------------------------------------------------------------------- #
def _mlp_kernel(n_total, k0, x_ref, w_ref, b_ref, out_ref):
    """Fused MLP forward for one batch tile.

    x_ref:   (TILE_B, k0)       input tile (features sublane-aligned)
    w_ref:   (n_total, P, P)    packed zero-padded weights, layout (in, out)
    b_ref:   (n_total, 1, P)    packed zero-padded biases
    out_ref: (TILE_B, 1)        output tile (masked store; tiny)
    """
    h = x_ref[...]  # f32

    # Hidden layers: h = leaky_relu(h @ W_i + b_i).  Padded lanes stay exactly
    # zero (zero weight cols, zero bias pads, max(0, 0.01*0) == 0).
    for i in range(n_total - 1):
        w = w_ref[i, :k0, :] if i == 0 else w_ref[i]            # (K_i, P)
        z = lax.dot_general(h, w, (((1,), (0,)), ((), ())),
                            preferred_element_type=jnp.float32)
        z = z + b_ref[i]                                        # (1, P) broadcast
        h = jnp.maximum(z, LEAKY_SLOPE * z)                     # leaky_relu

    # Output layer: (TILE_B, K) @ (K, 1) -> (TILE_B, 1).  Avoids an XLU
    # transpose of the whole activation tile; the 1-lane store is tiny.
    if n_total > 1:
        w_last = w_ref[n_total - 1, :, 0:1]                     # (P, 1) column
    else:
        w_last = w_ref[0, :k0, 0:1]                             # no hidden layers
    z = lax.dot_general(h, w_last, (((1,), (0,)), ((), ())),
                        preferred_element_type=jnp.float32)     # (TILE_B, 1)
    z = z + b_ref[n_total - 1, 0:1, 0:1]                        # scalar bias
    out_ref[...] = jnp.logaddexp(jnp.float32(0.0), z)           # stable softplus


# --------------------------------------------------------------------------- #
# Wrapper
# --------------------------------------------------------------------------- #
def _choose_tile_b(batch, tile_b):
    """Lane-multiple batch tile; prefer >= 2 grid steps for v7x megacore."""
    b_ceil = _round_up(max(batch, 1), LANE)
    t = min(_round_up(max(tile_b, LANE), LANE), b_ceil)
    if t >= b_ceil and b_ceil >= 2 * LANE:
        # Whole batch fit in one tile: split into two roughly-equal tiles so the
        # "parallel" axis actually shards across the two v7x TensorCores.
        n_lane_blocks = b_ceil // LANE
        t = ((n_lane_blocks + 1) // 2) * LANE
    return t


def pack_dnn_params(weights, biases):
    """Pack per-layer weights/biases into single zero-padded slabs (ONCE, in
    numpy) so the kernel sees 3 operands instead of 2*L+1 tiny ones and no
    per-call device-side packing is needed."""
    n_total = len(weights)
    max_dim = max(max(w.shape) for w in weights)
    P = max(LANE, _round_up(max_dim, LANE))
    w_slab = np.zeros((n_total, P, P), np.float32)
    b_slab = np.zeros((n_total, 1, P), np.float32)
    for i, (w, b) in enumerate(zip(weights, biases)):
        w = np.asarray(w, np.float32)
        b = np.asarray(b, np.float32).reshape(-1)
        w_slab[i, : w.shape[0], : w.shape[1]] = w
        b_slab[i, 0, : b.shape[0]] = b
    return jnp.asarray(w_slab), jnp.asarray(b_slab)


def dnn_forward(x, w_slab, b_slab, *, tile_b=1024):
    """Fused MLP forward.

    x:       (batch, input_dim) f32
    w_slab:  (n_layers, P, P)   packed weights from pack_dnn_params
    b_slab:  (n_layers, 1, P)   packed biases from pack_dnn_params
    returns: (batch, 1) f32
    """
    B, in_dim = x.shape
    n_total, P, _ = w_slab.shape
    k0 = _round_up(in_dim, SUBLANE)

    if x.dtype != jnp.float32:
        x = x.astype(jnp.float32)
    if k0 != in_dim:
        # Only when input_dim is not sublane-aligned: feature-pad with zeros
        # (padded columns hit zero weight rows -> exact zeros downstream).
        x = jnp.zeros((B, k0), jnp.float32).at[:, :in_dim].set(x)

    t = _choose_tile_b(B, tile_b)
    num_tiles = pl.cdiv(B, t)          # ragged last tile handled by BlockSpec

    # Scheduling hint for XLA around the custom call.
    flops = 2 * B * n_total * P * P
    bytes_accessed = (B * k0 + w_slab.size + b_slab.size + B) * 4
    cost = pl.CostEstimate(flops=flops, transcendentals=2 * B,
                           bytes_accessed=bytes_accessed)

    # VMEM budget: double-buffered x/out tiles + double-buffered constant slabs
    # + activation intermediates, with headroom; capped at v7x's 64 MiB.
    slab_bytes = (w_slab.size + b_slab.size) * 4
    needed = 4 * slab_bytes + 8 * t * max(k0, P) * 4 + (2 << 20)
    vmem_limit = int(min(64 * 2 ** 20, max(24 * 2 ** 20, needed)))

    kernel = functools.partial(_mlp_kernel, n_total, k0)

    out = pl.pallas_call(
        kernel,
        out_shape=jax.ShapeDtypeStruct((B, 1), jnp.float32),
        grid=(num_tiles,),
        in_specs=[
            pl.BlockSpec((t, k0), lambda i: (i, 0)),            # x: tiled over batch
            pl.BlockSpec((n_total, P, P), lambda i: (0, 0, 0)), # weights: VMEM-resident
            pl.BlockSpec((n_total, 1, P), lambda i: (0, 0, 0)), # biases: VMEM-resident
        ],
        out_specs=pl.BlockSpec((t, 1), lambda i: (i, 0)),
        compiler_params=pltpu.CompilerParams(
            dimension_semantics=("parallel",),
            vmem_limit_bytes=vmem_limit,
        ),
        cost_estimate=cost,
    )(x, w_slab, b_slab)

    return out


# --------------------------------------------------------------------------- #
# Params / reference
# --------------------------------------------------------------------------- #
def init_dnn_params(key, nb_layers, nb_units, input_dim):
    """Deterministic xavier_normal init (gain = calculate_gain('leaky_relu')),
    zero biases — matching the PyTorch module's weights_init."""
    dim_list = [input_dim] + [nb_units] * nb_layers + [1]
    gain = math.sqrt(2.0 / (1.0 + LEAKY_SLOPE ** 2))
    weights, biases = [], []
    for i in range(len(dim_list) - 1):
        fan_in, fan_out = dim_list[i], dim_list[i + 1]
        key, sub = jax.random.split(key)
        std = gain * math.sqrt(2.0 / (fan_in + fan_out))
        # stored as (in, out) == transpose of PyTorch's (out, in) weight
        w = std * jax.random.normal(sub, (fan_in, fan_out), dtype=jnp.float32)
        b = jnp.zeros((1, fan_out), dtype=jnp.float32)
        weights.append(w)
        biases.append(b)
    return weights, biases


def dnn_reference(x, weights, biases):
    """Pure-JAX reference implementation for checking the kernel."""
    h = x
    for i, (w, b) in enumerate(zip(weights, biases)):
        h = h @ w + b
        if i < len(weights) - 1:
            h = jnp.where(h > 0, h, LEAKY_SLOPE * h)
        else:
            h = jnp.logaddexp(0.0, h)
    return h


# --------------------------------------------------------------------------- #
# Self-test
# --------------------------------------------------------------------------- #
if __name__ == "__main__":
    nb_layers = 3
    nb_units = 32
    input_dim = 16
    batch = 8

    key = jax.random.PRNGKey(0)
    key, xkey = jax.random.split(key)
    x = jax.random.normal(xkey, (batch, input_dim), dtype=jnp.float32)

    weights, biases = init_dnn_params(key, nb_layers, nb_units, input_dim)
    # Pack once (hoisted out of the per-call path).
    w_slab, b_slab = pack_dnn_params(weights, biases)

    out = jax.block_until_ready(dnn_forward(x, w_slab, b_slab))
    ref = dnn_reference(x, weights, biases)
    assert out.shape == (batch, 1), out.shape
    assert jnp.allclose(out, ref, atol=1e-5, rtol=1e-5), (out, ref)

    # Multi-tile path with non-zero biases (including the scalar final-layer
    # bias).  B=200 -> two 128-row tiles (v7x megacore split), ragged last tile.
    key, xkey2 = jax.random.split(key)
    x2 = jax.random.normal(xkey2, (200, input_dim), dtype=jnp.float32)
    rand_biases = [
        0.1 * jax.random.normal(jax.random.PRNGKey(100 + i), b.shape, jnp.float32)
        for i, b in enumerate(biases)
    ]
    w_slab2, b_slab2 = pack_dnn_params(weights, rand_biases)
    out2 = jax.block_until_ready(dnn_forward(x2, w_slab2, b_slab2))
    ref2 = dnn_reference(x2, weights, rand_biases)
    assert out2.shape == (200, 1), out2.shape
    assert jnp.allclose(out2, ref2, atol=1e-5, rtol=1e-5)

    # Explicit small tile -> 3 grid steps, partial last tile (300 = 2*128 + 44).
    key, xkey3 = jax.random.split(key)
    x3 = jax.random.normal(xkey3, (300, input_dim), dtype=jnp.float32)
    out3 = jax.block_until_ready(dnn_forward(x3, w_slab2, b_slab2, tile_b=128))
    ref3 = dnn_reference(x3, weights, rand_biases)
    assert out3.shape == (300, 1), out3.shape
    assert jnp.allclose(out3, ref3, atol=1e-5, rtol=1e-5)

    print("KERNEL_OK")
</pallas_src>

<mosaic_0001>
module attributes {stable_mosaic.version = 11 : i64} {
  func.func @_mlp_kernel(%arg0: i32, %arg1: memref<128x16xf32, #tpu.memory_space<vmem>>, %arg2: memref<4x128x128xf32, #tpu.memory_space<vmem>>, %arg3: memref<4x1x128xf32, #tpu.memory_space<vmem>>, %arg4: memref<128x1xf32, #tpu.memory_space<vmem>>) attributes {dimension_semantics = [#tpu.dimension_semantics<parallel>], iteration_bounds = array<i64: 1>, scalar_prefetch = 0 : i64, scratch_operands = 0 : i64, tpu.core_type = #tpu.core_type<tc>, window_params = [{transform_indices = @transform_0, window_bounds = array<i64: 128, 16>}, {pipeline_mode = #tpu.pipeline_mode<synchronous>, transform_indices = @transform_1, window_bounds = array<i64: 4, 128, 128>}, {pipeline_mode = #tpu.pipeline_mode<synchronous>, transform_indices = @transform_2, window_bounds = array<i64: 4, 1, 128>}, {transform_indices = @transform_3, window_bounds = array<i64: 128, 1>}]} {
    %c0 = arith.constant 0 : index
    %c0_0 = arith.constant 0 : index
    %0 = vector.load %arg1[%c0, %c0_0] : memref<128x16xf32, #tpu.memory_space<vmem>>, vector<128x16xf32>
    %c0_1 = arith.constant 0 : index
    %c0_2 = arith.constant 0 : index
    %c0_3 = arith.constant 0 : index
    %1 = vector.load %arg2[%c0_1, %c0_2, %c0_3] : memref<4x128x128xf32, #tpu.memory_space<vmem>>, vector<1x16x128xf32>
    %2 = vector.shape_cast %1 : vector<1x16x128xf32> to vector<16x128xf32>
    %cst = arith.constant dense<0.000000e+00> : vector<128x128xf32>
    %3 = tpu.matmul %0, %2, %cst {dimension_numbers = #tpu.dot_dimension_numbers<[1], [0], [0], [1], [0, 0, 1, 1], [], []>} : vector<128x16xf32>, vector<16x128xf32>, vector<128x128xf32> -> vector<128x128xf32>
    %c0_4 = arith.constant 0 : index
    %c0_5 = arith.constant 0 : index
    %c0_6 = arith.constant 0 : index
    %4 = vector.load %arg3[%c0_4, %c0_5, %c0_6] : memref<4x1x128xf32, #tpu.memory_space<vmem>>, vector<1x1x128xf32>
    %5 = vector.shape_cast %4 : vector<1x1x128xf32> to vector<1x128xf32>
    %6 = vector.broadcast %5 : vector<1x128xf32> to vector<128x128xf32>
    %7 = arith.addf %3, %6 : vector<128x128xf32>
    %cst_7 = arith.constant 0.00999999977 : f32
    %8 = vector.broadcast %cst_7 : f32 to vector<128x128xf32>
    %9 = arith.mulf %8, %7 : vector<128x128xf32>
    %10 = arith.maximumf %7, %9 : vector<128x128xf32>
    %c1 = arith.constant 1 : index
    %c0_8 = arith.constant 0 : index
    %c0_9 = arith.constant 0 : index
    %11 = vector.load %arg2[%c1, %c0_8, %c0_9] : memref<4x128x128xf32, #tpu.memory_space<vmem>>, vector<1x128x128xf32>
    %12 = vector.shape_cast %11 : vector<1x128x128xf32> to vector<128x128xf32>
    %cst_10 = arith.constant dense<0.000000e+00> : vector<128x128xf32>
    %13 = tpu.matmul %10, %12, %cst_10 {dimension_numbers = #tpu.dot_dimension_numbers<[1], [0], [0], [1], [0, 0, 1, 1], [], []>} : vector<128x128xf32>, vector<128x128xf32>, vector<128x128xf32> -> vector<128x128xf32>
    %c1_11 = arith.constant 1 : index
    %c0_12 = arith.constant 0 : index
    %c0_13 = arith.constant 0 : index
    %14 = vector.load %arg3[%c1_11, %c0_12, %c0_13] : memref<4x1x128xf32, #tpu.memory_space<vmem>>, vector<1x1x128xf32>
    %15 = vector.shape_cast %14 : vector<1x1x128xf32> to vector<1x128xf32>
    %16 = vector.broadcast %15 : vector<1x128xf32> to vector<128x128xf32>
    %17 = arith.addf %13, %16 : vector<128x128xf32>
    %cst_14 = arith.constant 0.00999999977 : f32
    %18 = vector.broadcast %cst_14 : f32 to vector<128x128xf32>
    %19 = arith.mulf %18, %17 : vector<128x128xf32>
    %20 = arith.maximumf %17, %19 : vector<128x128xf32>
    %c2 = arith.constant 2 : index
    %c0_15 = arith.constant 0 : index
    %c0_16 = arith.constant 0 : index
    %21 = vector.load %arg2[%c2, %c0_15, %c0_16] : memref<4x128x128xf32, #tpu.memory_space<vmem>>, vector<1x128x128xf32>
    %22 = vector.shape_cast %21 : vector<1x128x128xf32> to vector<128x128xf32>
    %cst_17 = arith.constant dense<0.000000e+00> : vector<128x128xf32>
    %23 = tpu.matmul %20, %22, %cst_17 {dimension_numbers = #tpu.dot_dimension_numbers<[1], [0], [0], [1], [0, 0, 1, 1], [], []>} : vector<128x128xf32>, vector<128x128xf32>, vector<128x128xf32> -> vector<128x128xf32>
    %c2_18 = arith.constant 2 : index
    %c0_19 = arith.constant 0 : index
    %c0_20 = arith.constant 0 : index
    %24 = vector.load %arg3[%c2_18, %c0_19, %c0_20] : memref<4x1x128xf32, #tpu.memory_space<vmem>>, vector<1x1x128xf32>
    %25 = vector.shape_cast %24 : vector<1x1x128xf32> to vector<1x128xf32>
    %26 = vector.broadcast %25 : vector<1x128xf32> to vector<128x128xf32>
    %27 = arith.addf %23, %26 : vector<128x128xf32>
    %cst_21 = arith.constant 0.00999999977 : f32
    %28 = vector.broadcast %cst_21 : f32 to vector<128x128xf32>
    %29 = arith.mulf %28, %27 : vector<128x128xf32>
    %30 = arith.maximumf %27, %29 : vector<128x128xf32>
    %c3 = arith.constant 3 : index
    %c0_22 = arith.constant 0 : index
    %c0_23 = arith.constant 0 : index
    %31 = vector.load %arg2[%c3, %c0_22, %c0_23] : memref<4x128x128xf32, #tpu.memory_space<vmem>>, vector<1x128x1xf32>
    %32 = vector.shape_cast %31 : vector<1x128x1xf32> to vector<128x1xf32>
    %cst_24 = arith.constant dense<0.000000e+00> : vector<128x1xf32>
    %33 = tpu.matmul %30, %32, %cst_24 {dimension_numbers = #tpu.dot_dimension_numbers<[1], [0], [0], [1], [0, 0, 1, 1], [], []>} : vector<128x128xf32>, vector<128x1xf32>, vector<128x1xf32> -> vector<128x1xf32>
    %c3_25 = arith.constant 3 : index
    %c0_26 = arith.constant 0 : index
    %c0_27 = arith.constant 0 : index
    %34 = vector.load %arg3[%c3_25, %c0_26, %c0_27] : memref<4x1x128xf32, #tpu.memory_space<vmem>>, vector<1x1x1xf32>
    %35 = vector.shape_cast %34 : vector<1x1x1xf32> to vector<1x1xf32>
    %36 = vector.broadcast %35 : vector<1x1xf32> to vector<128x1xf32>
    %37 = arith.addf %33, %36 : vector<128x1xf32>
    %cst_28 = arith.constant 0.000000e+00 : f32
    %38 = vector.broadcast %cst_28 : f32 to vector<128x1xf32>
    %39 = arith.maximumf %38, %37 : vector<128x1xf32>
    %40 = vector.broadcast %cst_28 : f32 to vector<128x1xf32>
    %41 = arith.subf %40, %37 : vector<128x1xf32>
    %42 = arith.cmpf one, %41, %41 : vector<128x1xf32>
    %43 = vector.broadcast %cst_28 : f32 to vector<128x1xf32>
    %44 = arith.addf %43, %37 : vector<128x1xf32>
    %45 = math.absf %41 : vector<128x1xf32>
    %cst_29 = arith.constant 0.000000e+00 : f32
    %46 = vector.broadcast %cst_29 : f32 to vector<128x1xf32>
    %47 = arith.subf %46, %45 : vector<128x1xf32>
    %48 = math.exp %47 : vector<128x1xf32>
    %49 = math.log1p %48 : vector<128x1xf32>
    %50 = arith.addf %39, %49 : vector<128x1xf32>
    %51 = arith.select %42, %44, %50 : vector<128x1xi1>, vector<128x1xf32>
    %c0_30 = arith.constant 0 : index
    %c0_31 = arith.constant 0 : index
    %52 = vector.load %arg4[%c0_30, %c0_31] : memref<128x1xf32, #tpu.memory_space<vmem>>, vector<128x1xf32>
    tpu.vector_store %arg4[%c0_30, %c0_31], %51 {strides = array<i32>} : memref<128x1xf32, #tpu.memory_space<vmem>>, vector<128x1xf32>,
    return
  }
  func.func @transform_0(%arg0: i32) -> (i32, i32) {
    %c0_i32 = arith.constant 0 : i32
    %c0_i32_0 = arith.constant 0 : i32
    return %arg0, %c0_i32 : i32, i32
  }
  func.func @transform_1(%arg0: i32) -> (i32, i32, i32) {
    %c0_i32 = arith.constant 0 : i32
    %c0_i32_0 = arith.constant 0 : i32
    %c0_i32_1 = arith.constant 0 : i32
    %c0_i32_2 = arith.constant 0 : i32
    return %c0_i32, %c0_i32_0, %c0_i32_1 : i32, i32, i32
  }
  func.func @transform_2(%arg0: i32) -> (i32, i32, i32) {
    %c0_i32 = arith.constant 0 : i32
    %c0_i32_0 = arith.constant 0 : i32
    %c0_i32_1 = arith.constant 0 : i32
    %c0_i32_2 = arith.constant 0 : i32
    return %c0_i32, %c0_i32_0, %c0_i32_1 : i32, i32, i32
  }
  func.func @transform_3(%arg0: i32) -> (i32, i32) {
    %c0_i32 = arith.constant 0 : i32
    %c0_i32_0 = arith.constant 0 : i32
    return %arg0, %c0_i32 : i32, i32
  }
}

</mosaic_0001>

<llo_original>
// kernel: tpu_custom_call.1
$region0: #{tpu_custom_call.1}
  #allocation0 [shape = 'u32[]', space=smem, size = 0x4, offset = 0x4, fixed_abs, tag = 'smem constant byte address 0x4 - core index']
  #allocation1 [shape = 'u32[144,128]{1,0:T(1,128)}', space=vmem, size = 0x12000, scoped, tag = 'internal scratch']
  %s0 = inlined_call_operand.hbm [shape: f32[8,16], index: 0, kind: input, shape index: {}]
  %s1 = inlined_call_operand.hbm [shape: f32[4,128,128], index: 1, kind: input, shape index: {}]
  %s2 = inlined_call_operand.vmem [shape: f32[4,1,128], index: 2, kind: input, shape index: {}]
  %s3 = inlined_call_operand.vmem [shape: f32[8,1], index: 3, kind: output, shape index: {}]
  %s4 = sld [smem:[#allocation0]]
  $region64: #{tpu_custom_call.1} parent=0
    _
  %s6 = ssub.s32 1, %s4
  %s7 = scalar_select 0, %s6, %s4
  $region1: #{tpu_custom_call.1} parent=0
    #allocation2 [shape = 'u8[65536]{0}', space=vmem, size = 0x10000, scoped, tag = 'input window, operand 0, single buffered']
    #allocation3 [shape = 's32[1]{0}', space=sflag, size = 0x4, scoped, tag = 'scoped memory for tpu_custom_call.1']
    #allocation4 [shape = 'u8[262144]{0}', space=vmem, size = 0x40000, scoped, tag = 'input window, operand 1, single buffered']
    #allocation5 [shape = 's32[1]{0}', space=sflag, size = 0x4, scoped, tag = 'scoped memory for tpu_custom_call.1']
    #allocation6 [shape = 'u8[65536]{0}', space=vmem, size = 0x10000, scoped, tag = 'output window, operand 0, single buffered']
    %8 = vsyncpa [#allocation3], 0
    %9 = vsyncpa [#allocation5], 0
    // Predicated region
    $region2: #{tpu_custom_call.1} parent=1 // pred_check
      _
    $region3: #{tpu_custom_call.1} parent=1 // pred_check_branch
      %11 = sbr.rel (0) target = $region5
    $region4: #{tpu_custom_call.1} parent=1 // pred_region
      %s13 = ssub.s32 2048, 128
      %14 = vsyncadd [#allocation3], %s13
      %s15 = sshll.u32 [#allocation2], 4
      %s16 = int_to_ptr.vmem [resolvable:$true] %s15
      %21 = dma.hbm_to_vmem [thread:$0]  %s0, 128, %s16, [#allocation3], 128, 128, 8
    $region5: #{tpu_custom_call.1} parent=1 // pred_fallthru
      _
    // Predicated region
    $region6: #{tpu_custom_call.1} parent=1 // pred_check
      _
    $region7: #{tpu_custom_call.1} parent=1 // pred_check_branch
      %23 = sbr.rel (0) target = $region9
    $region8: #{tpu_custom_call.1} parent=1 // pred_region
      %s25 = ssub.s32 8192, 8192
      %26 = vsyncadd [#allocation5], %s25
      %s27 = sshll.u32 [#allocation4], 4
      %s28 = int_to_ptr.vmem [resolvable:$true] %s27
      %33 = dma.hbm_to_vmem [thread:$0]  %s1, 8192, %s28, [#allocation5], 128, 128, 8
    $region9: #{tpu_custom_call.1} parent=1 // pred_fallthru
      _
    // Predicated region
    $region10: #{tpu_custom_call.1} parent=1 // pred_check
      _
    $region11: #{tpu_custom_call.1} parent=1 // pred_check_branch
      %35 = sbr.rel (0) target = $region13
    $region12: #{tpu_custom_call.1} parent=1 // pred_region
      _
    $region13: #{tpu_custom_call.1} parent=1 // pred_fallthru
      _
    // Predicated region
    $region14: #{tpu_custom_call.1} parent=1 // pred_check
      _
    $region15: #{tpu_custom_call.1} parent=1 // pred_check_branch
      %37 = sbr.rel (0) target = $region17
    $region16: #{tpu_custom_call.1} parent=1 // pred_region
      %38 = dma.done [#allocation3], 2048
    $region17: #{tpu_custom_call.1} parent=1 // pred_fallthru
      _
    // Predicated region
    $region18: #{tpu_custom_call.1} parent=1 // pred_check
      _
    $region19: #{tpu_custom_call.1} parent=1 // pred_check_branch
      %40 = sbr.rel (0) target = $region21
    $region20: #{tpu_custom_call.1} parent=1 // pred_region
      %41 = dma.done [#allocation5], 8192
    $region21: #{tpu_custom_call.1} parent=1 // pred_fallthru
      _
    %v42 = vld [vmem:[#allocation2] sm:$0xff]
    %v43 = vld [vmem:[#allocation2 + $0x8] sm:$0xff]
    %v44 = vld [vmem:[#allocation2 + $0x10] sm:$0xff]
    %v45 = vld [vmem:[#allocation2 + $0x18] sm:$0xff]
    %v46 = vld [vmem:[#allocation2 + $0x20] sm:$0xff]
    %v47 = vld [vmem:[#allocation2 + $0x28] sm:$0xff]
    %v48 = vld [vmem:[#allocation2 + $0x30] sm:$0xff]
    %v49 = vld [vmem:[#allocation2 + $0x38] sm:$0xff]
    %v50 = vld [vmem:[#allocation2 + $0x40] sm:$0xff]
    %v51 = vld [vmem:[#allocation2 + $0x48] sm:$0xff]
    %v52 = vld [vmem:[#allocation2 + $0x50] sm:$0xff]
    %v53 = vld [vmem:[#allocation2 + $0x58] sm:$0xff]
    %v54 = vld [vmem:[#allocation2 + $0x60] sm:$0xff]
    %v55 = vld [vmem:[#allocation2 + $0x68] sm:$0xff]
    %v56 = vld [vmem:[#allocation2 + $0x70] sm:$0xff]
    %v57 = vld [vmem:[#allocation2 + $0x78] sm:$0xff]
    %v58 = vld [vmem:[#allocation4] sm:$0xff]
    %v59 = vld [vmem:[#allocation4 + $0x8] sm:$0xff]
    %v60 = vld [vmem:[%s2] sm:$0x1]
    %v62 = vlaneseq
    %v63 = vshrl.u32 %v62, 7
    %v64 = vsub.s32 0, %v63
    %v65 = vrot.slane %v60, %v64
    %vm67 = vcmask 130048
    %v69 = vsel %vm67, %v42, 0
    %v72 = vsel %vm67, %v43, 0
    %v75 = vsel %vm67, %v44, 0
    %v78 = vsel %vm67, %v45, 0
    %v81 = vsel %vm67, %v46, 0
    %v84 = vsel %vm67, %v47, 0
    %v87 = vsel %vm67, %v48, 0
    %v90 = vsel %vm67, %v49, 0
    %v93 = vsel %vm67, %v50, 0
    %v96 = vsel %vm67, %v51, 0
    %v99 = vsel %vm67, %v52, 0
    %v102 = vsel %vm67, %v53, 0
    %v105 = vsel %vm67, %v54, 0
    %v108 = vsel %vm67, %v55, 0
    %v111 = vsel %vm67, %v56, 0
    %v114 = vsel %vm67, %v57, 0
    %116 = vmatprep.subr.mxu0 0.0
    %117 = vmatpush1.msra.mxu0 %v58
    %118 = vmatprep.subr.mxu0 0.0
    %119 = vmatpush1.msra.mxu0 %v59
    %120 = vmatprep.subr.mxu0 0.0
    %121 = vmatpush1.msra.mxu0 0.0
    %122 = vmatprep.subr.mxu0 0.0
    %123 = vmatpush1.msra.mxu0 0.0
    %124 = vmatprep.subr.mxu0 0.0
    %125 = vmatpush1.msra.mxu0 0.0
    %126 = vmatprep.subr.mxu0 0.0
    %127 = vmatpush1.msra.mxu0 0.0
    %128 = vmatprep.subr.mxu0 0.0
    %129 = vmatpush1.msra.mxu0 0.0
    %130 = vmatprep.subr.mxu0 0.0
    %131 = vmatpush1.msra.mxu0 0.0
    %132 = vmatprep.subr.mxu0 0.0
    %133 = vmatpush1.msra.mxu0 0.0
    %134 = vmatprep.subr.mxu0 0.0
    %135 = vmatpush1.msra.mxu0 0.0
    %136 = vmatprep.subr.mxu0 0.0
    %137 = vmatpush1.msra.mxu0 0.0
    %138 = vmatprep.subr.mxu0 0.0
    %139 = vmatpush1.msra.mxu0 0.0
    %140 = vmatprep.subr.mxu0 0.0
    %141 = vmatpush1.msra.mxu0 0.0
    %142 = vmatprep.subr.mxu0 0.0
    %143 = vmatpush1.msra.mxu0 0.0
    %144 = vmatprep.subr.mxu0 0.0
    %145 = vmatpush1.msra.mxu0 0.0
    %146 = vmatprep.subr.mxu0 0.0
    %147 = vmatpush1.msra.mxu0 0.0
    %148 = vmatprep.subr.mxu0 0.0
    %149 = vmatpush1.msra.mxu0 0.0
    %150 = vmatprep.subr.mxu0 0.0
    %151 = vmatpush1.msra.mxu0 0.0
    %152 = vmatprep.subr.mxu0 0.0
    %153 = vmatpush1.msra.mxu0 0.0
    %154 = vmatprep.subr.mxu0 0.0
    %155 = vmatpush1.msra.mxu0 0.0
    %156 = vmatprep.subr.mxu0 0.0
    %157 = vmatpush1.msra.mxu0 0.0
    %158 = vmatprep.subr.mxu0 0.0
    %159 = vmatpush1.msra.mxu0 0.0
    %160 = vmatprep.subr.mxu0 0.0
    %161 = vmatpush1.msra.mxu0 0.0
    %162 = vmatprep.subr.mxu0 0.0
    %163 = vmatpush1.msra.mxu0 0.0
    %164 = vmatprep.subr.mxu0 0.0
    %165 = vmatpush1.msra.mxu0 0.0
    %166 = vmatprep.subr.mxu0 0.0
    %167 = vmatpush1.msra.mxu0 0.0
    %168 = vmatprep.subr.mxu0 0.0
    %169 = vmatpush1.msra.mxu0 0.0
    %170 = vmatprep.subr.mxu0 0.0
    %171 = vmatpush1.msra.mxu0 0.0
    %172 = vmatprep.subr.mxu0 0.0
    %173 = vmatpush1.msra.mxu0 0.0
    %174 = vmatprep.subr.mxu0 0.0
    %175 = vmatpush1.msra.mxu0 0.0
    %176 = vmatprep.subr.mxu0 0.0
    %177 = vmatpush1.msra.mxu0 0.0
    %178 = vmatprep.subr.mxu0 0.0
    %179 = vmatpush1.msra.mxu0 0.0
    %180 = vmatprep.mubr.f32.mxu0 0.0
    %181 = vmatmul.mubr.f32.gmra.mrb[0].mxu0 %v69
    %v182 = vpop.f32.mrb[0].mxu0
    %v183 = vadd.f32 %v65, %v182
    %v184 = vpop.f32.mrb[0].mxu0
    %185 = vmatprep.mubr.f32.mxu0 0.0
    %186 = vmatmul.mubr.f32.gmra.mrb[0].mxu0 %v72
    %v187 = vpop.f32.mrb[0].mxu0
    %v188 = vadd.f32 %v65, %v187
    %v189 = vpop.f32.mrb[0].mxu0
    %190 = vmatprep.mubr.f32.mxu0 0.0
    %191 = vmatmul.mubr.f32.gmra.mrb[0].mxu0 %v75
    %v192 = vpop.f32.mrb[0].mxu0
    %v193 = vadd.f32 %v65, %v192
    %v194 = vpop.f32.mrb[0].mxu0
    %195 = vmatprep.mubr.f32.mxu0 0.0
    %196 = vmatmul.mubr.f32.gmra.mrb[0].mxu0 %v78
    %v197 = vpop.f32.mrb[0].mxu0
    %v198 = vadd.f32 %v65, %v197
    %v199 = vpop.f32.mrb[0].mxu0
    %200 = vmatprep.mubr.f32.mxu0 0.0
    %201 = vmatmul.mubr.f32.gmra.mrb[0].mxu0 %v81
    %v202 = vpop.f32.mrb[0].mxu0
    %v203 = vadd.f32 %v65, %v202
    %v204 = vpop.f32.mrb[0].mxu0
    %205 = vmatprep.mubr.f32.mxu0 0.0
    %206 = vmatmul.mubr.f32.gmra.mrb[0].mxu0 %v84
    %v207 = vpop.f32.mrb[0].mxu0
    %v208 = vadd.f32 %v65, %v207
    %v209 = vpop.f32.mrb[0].mxu0
    %210 = vmatprep.mubr.f32.mxu0 0.0
    %211 = vmatmul.mubr.f32.gmra.mrb[0].mxu0 %v87
    %v212 = vpop.f32.mrb[0].mxu0
    %v213 = vadd.f32 %v65, %v212
    %v214 = vpop.f32.mrb[0].mxu0
    %215 = vmatprep.mubr.f32.mxu0 0.0
    %216 = vmatmul.mubr.f32.gmra.mrb[0].mxu0 %v90
    %v217 = vpop.f32.mrb[0].mxu0
    %v218 = vadd.f32 %v65, %v217
    %v219 = vpop.f32.mrb[0].mxu0
    %220 = vmatprep.mubr.f32.mxu0 0.0
    %221 = vmatmul.mubr.f32.gmra.mrb[0].mxu0 %v93
    %v222 = vpop.f32.mrb[0].mxu0
    %v223 = vadd.f32 %v65, %v222
    %v224 = vpop.f32.mrb[0].mxu0
    %225 = vmatprep.mubr.f32.mxu0 0.0
    %226 = vmatmul.mubr.f32.gmra.mrb[0].mxu0 %v96
    %v227 = vpop.f32.mrb[0].mxu0
    %v228 = vadd.f32 %v65, %v227
    %v229 = vpop.f32.mrb[0].mxu0
    %230 = vmatprep.mubr.f32.mxu0 0.0
    %231 = vmatmul.mubr.f32.gmra.mrb[0].mxu0 %v99
    %v232 = vpop.f32.mrb[0].mxu0
    %v233 = vadd.f32 %v65, %v232
    %v234 = vpop.f32.mrb[0].mxu0
    %235 = vmatprep.mubr.f32.mxu0 0.0
    %236 = vmatmul.mubr.f32.gmra.mrb[0].mxu0 %v102
    %v237 = vpop.f32.mrb[0].mxu0
    %v238 = vadd.f32 %v65, %v237
    %v239 = vpop.f32.mrb[0].mxu0
    %240 = vmatprep.mubr.f32.mxu0 0.0
    %241 = vmatmul.mubr.f32.gmra.mrb[0].mxu0 %v105
    %v242 = vpop.f32.mrb[0].mxu0
    %v243 = vadd.f32 %v65, %v242
    %v244 = vpop.f32.mrb[0].mxu0
    %245 = vmatprep.mubr.f32.mxu0 0.0
    %246 = vmatmul.mubr.f32.gmra.mrb[0].mxu0 %v108
    %v247 = vpop.f32.mrb[0].mxu0
    %v248 = vadd.f32 %v65, %v247
    %v249 = vpop.f32.mrb[0].mxu0
    %250 = vmatprep.mubr.f32.mxu0 0.0
    %251 = vmatmul.mubr.f32.gmra.mrb[0].mxu0 %v111
    %v252 = vpop.f32.mrb[0].mxu0
    %v253 = vadd.f32 %v65, %v252
    %v254 = vpop.f32.mrb[0].mxu0
    %255 = vmatprep.mubr.f32.mxu0 0.0
    %256 = vmatmul.mubr.f32.gmra.mrb[0].mxu0 %v114
    %v257 = vpop.f32.mrb[0].mxu0
    %v258 = vadd.f32 %v65, %v257
    %v259 = vpop.f32.mrb[0].mxu0
    %260 = vdwg.mxu0
    %v261 = vmul.f32 %v183, 0.01
    %v262 = vmul.f32 %v188, 0.01
    %v263 = vmul.f32 %v193, 0.01
    %v264 = vmul.f32 %v198, 0.01
    %v265 = vmul.f32 %v203, 0.01
    %v266 = vmul.f32 %v208, 0.01
    %v267 = vmul.f32 %v213, 0.01
    %v268 = vmul.f32 %v218, 0.01
    %v269 = vmul.f32 %v223, 0.01
    %v270 = vmul.f32 %v228, 0.01
    %v271 = vmul.f32 %v233, 0.01
    %v272 = vmul.f32 %v238, 0.01
    %v273 = vmul.f32 %v243, 0.01
    %v274 = vmul.f32 %v248, 0.01
    %v275 = vmul.f32 %v253, 0.01
    %v276 = vmul.f32 %v258, 0.01
    %v277 = vmax.f32 %v183, %v261
    %v278 = vmax.f32 %v188, %v262
    %v279 = vmax.f32 %v193, %v263
    %v280 = vmax.f32 %v198, %v264
    %v281 = vmax.f32 %v203, %v265
    %v282 = vmax.f32 %v208, %v266
    %v283 = vmax.f32 %v213, %v267
    %v284 = vmax.f32 %v218, %v268
    %v285 = vmax.f32 %v223, %v269
    %v286 = vmax.f32 %v228, %v270
    %v287 = vmax.f32 %v233, %v271
    %v288 = vmax.f32 %v238, %v272
    %v289 = vmax.f32 %v243, %v273
    %v290 = vmax.f32 %v248, %v274
    %v291 = vmax.f32 %v253, %v275
    %v292 = vmax.f32 %v258, %v276
    %s293 = scalar_lea.vmem [#allocation4], 128
    %v294 = vld [vmem:[%s293] sm:$0xff]
    %v295 = vld [vmem:[%s293 + $0x8] sm:$0xff]
    %v296 = vld [vmem:[%s293 + $0x10] sm:$0xff]
    %v297 = vld [vmem:[%s293 + $0x18] sm:$0xff]
    %v298 = vld [vmem:[%s293 + $0x20] sm:$0xff]
    %v299 = vld [vmem:[%s293 + $0x28] sm:$0xff]
    %v300 = vld [vmem:[%s293 + $0x30] sm:$0xff]
    %v301 = vld [vmem:[%s293 + $0x38] sm:$0xff]
    %v302 = vld [vmem:[%s293 + $0x40] sm:$0xff]
    %v303 = vld [vmem:[%s293 + $0x48] sm:$0xff]
    %v304 = vld [vmem:[%s293 + $0x50] sm:$0xff]
    %v305 = vld [vmem:[%s293 + $0x58] sm:$0xff]
    %v306 = vld [vmem:[%s293 + $0x60] sm:$0xff]
    %v307 = vld [vmem:[%s293 + $0x68] sm:$0xff]
    %v308 = vld [vmem:[%s293 + $0x70] sm:$0xff]
    %v309 = vld [vmem:[%s293 + $0x78] sm:$0xff]
    %s310 = scalar_lea.vmem %s2, 1
    %v311 = vld [vmem:[%s310] sm:$0x1]
    %v313 = vlaneseq
    %v314 = vshrl.u32 %v313, 7
    %v315 = vsub.s32 0, %v314
    %v316 = vrot.slane %v311, %v315
    %318 = vmatprep.subr.mxu0 0.0
    %319 = vmatpush1.msra.mxu0 %v294
    %320 = vmatprep.subr.mxu0 0.0
    %321 = vmatpush1.msra.mxu0 %v295
    %322 = vmatprep.subr.mxu0 0.0
    %323 = vmatpush1.msra.mxu0 %v296
    %324 = vmatprep.subr.mxu0 0.0
    %325 = vmatpush1.msra.mxu0 %v297
    %326 = vmatprep.subr.mxu0 0.0
    %327 = vmatpush1.msra.mxu0 %v298
    %328 = vmatprep.subr.mxu0 0.0
    %329 = vmatpush1.msra.mxu0 %v299
    %330 = vmatprep.subr.mxu0 0.0
    %331 = vmatpush1.msra.mxu0 %v300
    %332 = vmatprep.subr.mxu0 0.0
    %333 = vmatpush1.msra.mxu0 %v301
    %334 = vmatprep.subr.mxu0 0.0
    %335 = vmatpush1.msra.mxu0 %v302
    %336 = vmatprep.subr.mxu0 0.0
    %337 = vmatpush1.msra.mxu0 %v303
    %338 = vmatprep.subr.mxu0 0.0
    %339 = vmatpush1.msra.mxu0 %v304
    %340 = vmatprep.subr.mxu0 0.0
    %341 = vmatpush1.msra.mxu0 %v305
    %342 = vmatprep.subr.mxu0 0.0
    %343 = vmatpush1.msra.mxu0 %v306
    %344 = vmatprep.subr.mxu0 0.0
    %345 = vmatpush1.msra.mxu0 %v307
    %346 = vmatprep.subr.mxu0 0.0
    %347 = vmatpush1.msra.mxu0 %v308
    %348 = vmatprep.subr.mxu0 0.0
    %349 = vmatpush1.msra.mxu0 %v309
    %350 = vmatprep.subr.mxu0 0.0
    %351 = vmatpush1.msra.mxu0 0.0
    %352 = vmatprep.subr.mxu0 0.0
    %353 = vmatpush1.msra.mxu0 0.0
    %354 = vmatprep.subr.mxu0 0.0
    %355 = vmatpush1.msra.mxu0 0.0
    %356 = vmatprep.subr.mxu0 0.0
    %357 = vmatpush1.msra.mxu0 0.0
    %358 = vmatprep.subr.mxu0 0.0
    %359 = vmatpush1.msra.mxu0 0.0
    %360 = vmatprep.subr.mxu0 0.0
    %361 = vmatpush1.msra.mxu0 0.0
    %362 = vmatprep.subr.mxu0 0.0
    %363 = vmatpush1.msra.mxu0 0.0
    %364 = vmatprep.subr.mxu0 0.0
    %365 = vmatpush1.msra.mxu0 0.0
    %366 = vmatprep.subr.mxu0 0.0
    %367 = vmatpush1.msra.mxu0 0.0
    %368 = vmatprep.subr.mxu0 0.0
    %369 = vmatpush1.msra.mxu0 0.0
    %370 = vmatprep.subr.mxu0 0.0
    %371 = vmatpush1.msra.mxu0 0.0
    %372 = vmatprep.subr.mxu0 0.0
    %373 = vmatpush1.msra.mxu0 0.0
    %374 = vmatprep.subr.mxu0 0.0
    %375 = vmatpush1.msra.mxu0 0.0
    %376 = vmatprep.subr.mxu0 0.0
    %377 = vmatpush1.msra.mxu0 0.0
    %378 = vmatprep.subr.mxu0 0.0
    %379 = vmatpush1.msra.mxu0 0.0
    %380 = vmatprep.subr.mxu0 0.0
    %381 = vmatpush1.msra.mxu0 0.0
    %382 = vmatprep.mubr.f32.mxu0 0.0
    %383 = vmatmul.mubr.f32.gmra.mrb[0].mxu0 %v277
    %v384 = vpop.f32.mrb[0].mxu0
    %v385 = vadd.f32 %v316, %v384
    %v386 = vpop.f32.mrb[0].mxu0
    %387 = vmatprep.mubr.f32.mxu0 0.0
    %388 = vmatmul.mubr.f32.gmra.mrb[0].mxu0 %v278
    %v389 = vpop.f32.mrb[0].mxu0
    %v390 = vadd.f32 %v316, %v389
    %v391 = vpop.f32.mrb[0].mxu0
    %392 = vmatprep.mubr.f32.mxu0 0.0
    %393 = vmatmul.mubr.f32.gmra.mrb[0].mxu0 %v279
    %v394 = vpop.f32.mrb[0].mxu0
    %v395 = vadd.f32 %v316, %v394
    %v396 = vpop.f32.mrb[0].mxu0
    %397 = vmatprep.mubr.f32.mxu0 0.0
    %398 = vmatmul.mubr.f32.gmra.mrb[0].mxu0 %v280
    %v399 = vpop.f32.mrb[0].mxu0
    %v400 = vadd.f32 %v316, %v399
    %v401 = vpop.f32.mrb[0].mxu0
    %402 = vmatprep.mubr.f32.mxu0 0.0
    %403 = vmatmul.mubr.f32.gmra.mrb[0].mxu0 %v281
    %v404 = vpop.f32.mrb[0].mxu0
    %v405 = vadd.f32 %v316, %v404
    %v406 = vpop.f32.mrb[0].mxu0
    %407 = vmatprep.mubr.f32.mxu0 0.0
    %408 = vmatmul.mubr.f32.gmra.mrb[0].mxu0 %v282
    %v409 = vpop.f32.mrb[0].mxu0
    %v410 = vadd.f32 %v316, %v409
    %v411 = vpop.f32.mrb[0].mxu0
    %412 = vmatprep.mubr.f32.mxu0 0.0
    %413 = vmatmul.mubr.f32.gmra.mrb[0].mxu0 %v283
    %v414 = vpop.f32.mrb[0].mxu0
    %v415 = vadd.f32 %v316, %v414
    %v416 = vpop.f32.mrb[0].mxu0
    %417 = vmatprep.mubr.f32.mxu0 0.0
    %418 = vmatmul.mubr.f32.gmra.mrb[0].mxu0 %v284
    %v419 = vpop.f32.mrb[0].mxu0
    %v420 = vadd.f32 %v316, %v419
    %v421 = vpop.f32.mrb[0].mxu0
    %422 = vmatprep.mubr.f32.mxu0 0.0
    %423 = vmatmul.mubr.f32.gmra.mrb[0].mxu0 %v285
    %v424 = vpop.f32.mrb[0].mxu0
    %v425 = vadd.f32 %v316, %v424
    %v426 = vpop.f32.mrb[0].mxu0
    %427 = vmatprep.mubr.f32.mxu0 0.0
    %428 = vmatmul.mubr.f32.gmra.mrb[0].mxu0 %v286
    %v429 = vpop.f32.mrb[0].mxu0
    %v430 = vadd.f32 %v316, %v429
    %v431 = vpop.f32.mrb[0].mxu0
    %432 = vmatprep.mubr.f32.mxu0 0.0
    %433 = vmatmul.mubr.f32.gmra.mrb[0].mxu0 %v287
    %v434 = vpop.f32.mrb[0].mxu0
    %v435 = vadd.f32 %v316, %v434
    %v436 = vpop.f32.mrb[0].mxu0
    %437 = vmatprep.mubr.f32.mxu0 0.0
    %438 = vmatmul.mubr.f32.gmra.mrb[0].mxu0 %v288
    %v439 = vpop.f32.mrb[0].mxu0
    %v440 = vadd.f32 %v316, %v439
    %v441 = vpop.f32.mrb[0].mxu0
    %442 = vmatprep.mubr.f32.mxu0 0.0
    %443 = vmatmul.mubr.f32.gmra.mrb[0].mxu0 %v289
    %v444 = vpop.f32.mrb[0].mxu0
    %v445 = vadd.f32 %v316, %v444
    %v446 = vpop.f32.mrb[0].mxu0
    %447 = vmatprep.mubr.f32.mxu0 0.0
    %448 = vmatmul.mubr.f32.gmra.mrb[0].mxu0 %v290
    %v449 = vpop.f32.mrb[0].mxu0
    %v450 = vadd.f32 %v316, %v449
    %v451 = vpop.f32.mrb[0].mxu0
    %452 = vmatprep.mubr.f32.mxu0 0.0
    %453 = vmatmul.mubr.f32.gmra.mrb[0].mxu0 %v291
    %v454 = vpop.f32.mrb[0].mxu0
    %v455 = vadd.f32 %v316, %v454
    %v456 = vpop.f32.mrb[0].mxu0
    %457 = vmatprep.mubr.f32.mxu0 0.0
    %458 = vmatmul.mubr.f32.gmra.mrb[0].mxu0 %v292
    %v459 = vpop.f32.mrb[0].mxu0
    %v460 = vadd.f32 %v316, %v459
    %v461 = vpop.f32.mrb[0].mxu0
    %462 = vdwg.mxu0
    %v463 = vmul.f32 %v385, 0.01
    %v464 = vmul.f32 %v390, 0.01
    %v465 = vmul.f32 %v395, 0.01
    %v466 = vmul.f32 %v400, 0.01
    %v467 = vmul.f32 %v405, 0.01
    %v468 = vmul.f32 %v410, 0.01
    %v469 = vmul.f32 %v415, 0.01
    %v470 = vmul.f32 %v420, 0.01
    %v471 = vmul.f32 %v425, 0.01
    %v472 = vmul.f32 %v430, 0.01
    %v473 = vmul.f32 %v435, 0.01
    %v474 = vmul.f32 %v440, 0.01
    %v475 = vmul.f32 %v445, 0.01
    %v476 = vmul.f32 %v450, 0.01
    %v477 = vmul.f32 %v455, 0.01
    %v478 = vmul.f32 %v460, 0.01
    %v479 = vmax.f32 %v385, %v463
    %v480 = vmax.f32 %v390, %v464
    %v481 = vmax.f32 %v395, %v465
    %v482 = vmax.f32 %v400, %v466
    %v483 = vmax.f32 %v405, %v467
    %v484 = vmax.f32 %v410, %v468
    %v485 = vmax.f32 %v415, %v469
    %v486 = vmax.f32 %v420, %v470
    %v487 = vmax.f32 %v425, %v471
    %v488 = vmax.f32 %v430, %v472
    %v489 = vmax.f32 %v435, %v473
    %v490 = vmax.f32 %v440, %v474
    %v491 = vmax.f32 %v445, %v475
    %v492 = vmax.f32 %v450, %v476
    %v493 = vmax.f32 %v455, %v477
    %v494 = vmax.f32 %v460, %v478
    %s495 = scalar_lea.vmem [#allocation4], 256
    %v496 = vld [vmem:[%s495] sm:$0xff]
    %v497 = vld [vmem:[%s495 + $0x8] sm:$0xff]
    %v498 = vld [vmem:[%s495 + $0x10] sm:$0xff]
    %v499 = vld [vmem:[%s495 + $0x18] sm:$0xff]
    %v500 = vld [vmem:[%s495 + $0x20] sm:$0xff]
    %v501 = vld [vmem:[%s495 + $0x28] sm:$0xff]
    %v502 = vld [vmem:[%s495 + $0x30] sm:$0xff]
    %v503 = vld [vmem:[%s495 + $0x38] sm:$0xff]
    %v504 = vld [vmem:[%s495 + $0x40] sm:$0xff]
    %v505 = vld [vmem:[%s495 + $0x48] sm:$0xff]
    %v506 = vld [vmem:[%s495 + $0x50] sm:$0xff]
    %v507 = vld [vmem:[%s495 + $0x58] sm:$0xff]
    %v508 = vld [vmem:[%s495 + $0x60] sm:$0xff]
    %v509 = vld [vmem:[%s495 + $0x68] sm:$0xff]
    %v510 = vld [vmem:[%s495 + $0x70] sm:$0xff]
    %v511 = vld [vmem:[%s495 + $0x78] sm:$0xff]
    %s512 = scalar_lea.vmem %s2, 2
    %v513 = vld [vmem:[%s512] sm:$0x1]
    %v515 = vlaneseq
    %v516 = vshrl.u32 %v515, 7
    %v517 = vsub.s32 0, %v516
    %v518 = vrot.slane %v513, %v517
    %520 = vmatprep.subr.mxu0 0.0
    %521 = vmatpush1.msra.mxu0 %v496
    %522 = vmatprep.subr.mxu0 0.0
    %523 = vmatpush1.msra.mxu0 %v497
    %524 = vmatprep.subr.mxu0 0.0
    %525 = vmatpush1.msra.mxu0 %v498
    %526 = vmatprep.subr.mxu0 0.0
    %527 = vmatpush1.msra.mxu0 %v499
    %528 = vmatprep.subr.mxu0 0.0
    %529 = vmatpush1.msra.mxu0 %v500
    %530 = vmatprep.subr.mxu0 0.0
    %531 = vmatpush1.msra.mxu0 %v501
    %532 = vmatprep.subr.mxu0 0.0
    %533 = vmatpush1.msra.mxu0 %v502
    %534 = vmatprep.subr.mxu0 0.0
    %535 = vmatpush1.msra.mxu0 %v503
    %536 = vmatprep.subr.mxu0 0.0
    %537 = vmatpush1.msra.mxu0 %v504
    %538 = vmatprep.subr.mxu0 0.0
    %539 = vmatpush1.msra.mxu0 %v505
    %540 = vmatprep.subr.mxu0 0.0
    %541 = vmatpush1.msra.mxu0 %v506
    %542 = vmatprep.subr.mxu0 0.0
    %543 = vmatpush1.msra.mxu0 %v507
    %544 = vmatprep.subr.mxu0 0.0
    %545 = vmatpush1.msra.mxu0 %v508
    %546 = vmatprep.subr.mxu0 0.0
    %547 = vmatpush1.msra.mxu0 %v509
    %548 = vmatprep.subr.mxu0 0.0
    %549 = vmatpush1.msra.mxu0 %v510
    %550 = vmatprep.subr.mxu0 0.0
    %551 = vmatpush1.msra.mxu0 %v511
    %552 = vmatprep.subr.mxu0 0.0
    %553 = vmatpush1.msra.mxu0 0.0
    %554 = vmatprep.subr.mxu0 0.0
    %555 = vmatpush1.msra.mxu0 0.0
    %556 = vmatprep.subr.mxu0 0.0
    %557 = vmatpush1.msra.mxu0 0.0
    %558 = vmatprep.subr.mxu0 0.0
    %559 = vmatpush1.msra.mxu0 0.0
    %560 = vmatprep.subr.mxu0 0.0
    %561 = vmatpush1.msra.mxu0 0.0
    %562 = vmatprep.subr.mxu0 0.0
    %563 = vmatpush1.msra.mxu0 0.0
    %564 = vmatprep.subr.mxu0 0.0
    %565 = vmatpush1.msra.mxu0 0.0
    %566 = vmatprep.subr.mxu0 0.0
    %567 = vmatpush1.msra.mxu0 0.0
    %568 = vmatprep.subr.mxu0 0.0
    %569 = vmatpush1.msra.mxu0 0.0
    %570 = vmatprep.subr.mxu0 0.0
    %571 = vmatpush1.msra.mxu0 0.0
    %572 = vmatprep.subr.mxu0 0.0
    %573 = vmatpush1.msra.mxu0 0.0
    %574 = vmatprep.subr.mxu0 0.0
    %575 = vmatpush1.msra.mxu0 0.0
    %576 = vmatprep.subr.mxu0 0.0
    %577 = vmatpush1.msra.mxu0 0.0
    %578 = vmatprep.subr.mxu0 0.0
    %579 = vmatpush1.msra.mxu0 0.0
    %580 = vmatprep.subr.mxu0 0.0
    %581 = vmatpush1.msra.mxu0 0.0
    %582 = vmatprep.subr.mxu0 0.0
    %583 = vmatpush1.msra.mxu0 0.0
    %584 = vmatprep.mubr.f32.mxu0 0.0
    %585 = vmatmul.mubr.f32.gmra.mrb[0].mxu0 %v479
    %v586 = vpop.f32.mrb[0].mxu0
    %v587 = vadd.f32 %v518, %v586
    %v588 = vpop.f32.mrb[0].mxu0
    %589 = vmatprep.mubr.f32.mxu0 0.0
    %590 = vmatmul.mubr.f32.gmra.mrb[0].mxu0 %v480
    %v591 = vpop.f32.mrb[0].mxu0
    %v592 = vadd.f32 %v518, %v591
    %v593 = vpop.f32.mrb[0].mxu0
    %594 = vmatprep.mubr.f32.mxu0 0.0
    %595 = vmatmul.mubr.f32.gmra.mrb[0].mxu0 %v481
    %v596 = vpop.f32.mrb[0].mxu0
    %v597 = vadd.f32 %v518, %v596
    %v598 = vpop.f32.mrb[0].mxu0
    %599 = vmatprep.mubr.f32.mxu0 0.0
    %600 = vmatmul.mubr.f32.gmra.mrb[0].mxu0 %v482
    %v601 = vpop.f32.mrb[0].mxu0
    %v602 = vadd.f32 %v518, %v601
    %v603 = vpop.f32.mrb[0].mxu0
    %604 = vmatprep.mubr.f32.mxu0 0.0
    %605 = vmatmul.mubr.f32.gmra.mrb[0].mxu0 %v483
    %v606 = vpop.f32.mrb[0].mxu0
    %v607 = vadd.f32 %v518, %v606
    %v608 = vpop.f32.mrb[0].mxu0
    %609 = vmatprep.mubr.f32.mxu0 0.0
    %610 = vmatmul.mubr.f32.gmra.mrb[0].mxu0 %v484
    %v611 = vpop.f32.mrb[0].mxu0
    %v612 = vadd.f32 %v518, %v611
    %v613 = vpop.f32.mrb[0].mxu0
    %614 = vmatprep.mubr.f32.mxu0 0.0
    %615 = vmatmul.mubr.f32.gmra.mrb[0].mxu0 %v485
    %v616 = vpop.f32.mrb[0].mxu0
    %v617 = vadd.f32 %v518, %v616
    %v618 = vpop.f32.mrb[0].mxu0
    %619 = vmatprep.mubr.f32.mxu0 0.0
    %620 = vmatmul.mubr.f32.gmra.mrb[0].mxu0 %v486
    %v621 = vpop.f32.mrb[0].mxu0
    %v622 = vadd.f32 %v518, %v621
    %v623 = vpop.f32.mrb[0].mxu0
    %624 = vmatprep.mubr.f32.mxu0 0.0
    %625 = vmatmul.mubr.f32.gmra.mrb[0].mxu0 %v487
    %v626 = vpop.f32.mrb[0].mxu0
    %v627 = vadd.f32 %v518, %v626
    %v628 = vpop.f32.mrb[0].mxu0
    %629 = vmatprep.mubr.f32.mxu0 0.0
    %630 = vmatmul.mubr.f32.gmra.mrb[0].mxu0 %v488
    %v631 = vpop.f32.mrb[0].mxu0
    %v632 = vadd.f32 %v518, %v631
    %v633 = vpop.f32.mrb[0].mxu0
    %634 = vmatprep.mubr.f32.mxu0 0.0
    %635 = vmatmul.mubr.f32.gmra.mrb[0].mxu0 %v489
    %v636 = vpop.f32.mrb[0].mxu0
    %v637 = vadd.f32 %v518, %v636
    %v638 = vpop.f32.mrb[0].mxu0
    %639 = vmatprep.mubr.f32.mxu0 0.0
    %640 = vmatmul.mubr.f32.gmra.mrb[0].mxu0 %v490
    %v641 = vpop.f32.mrb[0].mxu0
    %v642 = vadd.f32 %v518, %v641
    %v643 = vpop.f32.mrb[0].mxu0
    %644 = vmatprep.mubr.f32.mxu0 0.0
    %645 = vmatmul.mubr.f32.gmra.mrb[0].mxu0 %v491
    %v646 = vpop.f32.mrb[0].mxu0
    %v647 = vadd.f32 %v518, %v646
    %v648 = vpop.f32.mrb[0].mxu0
    %649 = vmatprep.mubr.f32.mxu0 0.0
    %650 = vmatmul.mubr.f32.gmra.mrb[0].mxu0 %v492
    %v651 = vpop.f32.mrb[0].mxu0
    %v652 = vadd.f32 %v518, %v651
    %v653 = vpop.f32.mrb[0].mxu0
    %654 = vmatprep.mubr.f32.mxu0 0.0
    %655 = vmatmul.mubr.f32.gmra.mrb[0].mxu0 %v493
    %v656 = vpop.f32.mrb[0].mxu0
    %v657 = vadd.f32 %v518, %v656
    %v658 = vpop.f32.mrb[0].mxu0
    %659 = vmatprep.mubr.f32.mxu0 0.0
    %660 = vmatmul.mubr.f32.gmra.mrb[0].mxu0 %v494
    %v661 = vpop.f32.mrb[0].mxu0
    %v662 = vadd.f32 %v518, %v661
    %v663 = vpop.f32.mrb[0].mxu0
    %664 = vdwg.mxu0
    %v665 = vmul.f32 %v587, 0.01
    %v666 = vmul.f32 %v592, 0.01
    %v667 = vmul.f32 %v597, 0.01
    %v668 = vmul.f32 %v602, 0.01
    %v669 = vmul.f32 %v607, 0.01
    %v670 = vmul.f32 %v612, 0.01
    %v671 = vmul.f32 %v617, 0.01
    %v672 = vmul.f32 %v622, 0.01
    %v673 = vmul.f32 %v627, 0.01
    %v674 = vmul.f32 %v632, 0.01
    %v675 = vmul.f32 %v637, 0.01
    %v676 = vmul.f32 %v642, 0.01
    %v677 = vmul.f32 %v647, 0.01
    %v678 = vmul.f32 %v652, 0.01
    %v679 = vmul.f32 %v657, 0.01
    %v680 = vmul.f32 %v662, 0.01
    %v681 = vmax.f32 %v587, %v665
    %v682 = vmax.f32 %v592, %v666
    %v683 = vmax.f32 %v597, %v667
    %v684 = vmax.f32 %v602, %v668
    %v685 = vmax.f32 %v607, %v669
    %v686 = vmax.f32 %v612, %v670
    %v687 = vmax.f32 %v617, %v671
    %v688 = vmax.f32 %v622, %v672
    %v689 = vmax.f32 %v627, %v673
    %v690 = vmax.f32 %v632, %v674
    %v691 = vmax.f32 %v637, %v675
    %v692 = vmax.f32 %v642, %v676
    %v693 = vmax.f32 %v647, %v677
    %v694 = vmax.f32 %v652, %v678
    %v695 = vmax.f32 %v657, %v679
    %v696 = vmax.f32 %v662, %v680
    %s697 = scalar_lea.vmem [#allocation4], 384
    %v698 = vld [vmem:[%s697] sm:$0xff]
    %v699 = vld [vmem:[%s697 + $0x8] sm:$0xff]
    %v700 = vld [vmem:[%s697 + $0x10] sm:$0xff]
    %v701 = vld [vmem:[%s697 + $0x18] sm:$0xff]
    %v702 = vld [vmem:[%s697 + $0x20] sm:$0xff]
    %v703 = vld [vmem:[%s697 + $0x28] sm:$0xff]
    %v704 = vld [vmem:[%s697 + $0x30] sm:$0xff]
    %v705 = vld [vmem:[%s697 + $0x38] sm:$0xff]
    %v706 = vld [vmem:[%s697 + $0x40] sm:$0xff]
    %v707 = vld [vmem:[%s697 + $0x48] sm:$0xff]
    %v708 = vld [vmem:[%s697 + $0x50] sm:$0xff]
    %v709 = vld [vmem:[%s697 + $0x58] sm:$0xff]
    %v710 = vld [vmem:[%s697 + $0x60] sm:$0xff]
    %v711 = vld [vmem:[%s697 + $0x68] sm:$0xff]
    %v712 = vld [vmem:[%s697 + $0x70] sm:$0xff]
    %v713 = vld [vmem:[%s697 + $0x78] sm:$0xff]
    %s714 = scalar_lea.vmem %s2, 3
    %v715 = vld [vmem:[%s714] sm:$0x1]
    %v717 = vlaneseq
    %v718 = vshrl.u32 %v717, 7
    %v719 = vsub.s32 0, %v718
    %v720 = vrot.slane %v715, %v719
    %722 = vmatprep.subr.mxu0 0.0
    %723 = vmatpush1.msra.mxu0 %v698
    %724 = vmatprep.subr.mxu0 0.0
    %725 = vmatpush1.msra.mxu0 %v699
    %726 = vmatprep.subr.mxu0 0.0
    %727 = vmatpush1.msra.mxu0 %v700
    %728 = vmatprep.subr.mxu0 0.0
    %729 = vmatpush1.msra.mxu0 %v701
    %730 = vmatprep.subr.mxu0 0.0
    %731 = vmatpush1.msra.mxu0 %v702
    %732 = vmatprep.subr.mxu0 0.0
    %733 = vmatpush1.msra.mxu0 %v703
    %734 = vmatprep.subr.mxu0 0.0
    %735 = vmatpush1.msra.mxu0 %v704
    %736 = vmatprep.subr.mxu0 0.0
    %737 = vmatpush1.msra.mxu0 %v705
    %738 = vmatprep.subr.mxu0 0.0
    %739 = vmatpush1.msra.mxu0 %v706
    %740 = vmatprep.subr.mxu0 0.0
    %741 = vmatpush1.msra.mxu0 %v707
    %742 = vmatprep.subr.mxu0 0.0
    %743 = vmatpush1.msra.mxu0 %v708
    %744 = vmatprep.subr.mxu0 0.0
    %745 = vmatpush1.msra.mxu0 %v709
    %746 = vmatprep.subr.mxu0 0.0
    %747 = vmatpush1.msra.mxu0 %v710
    %748 = vmatprep.subr.mxu0 0.0
    %749 = vmatpush1.msra.mxu0 %v711
    %750 = vmatprep.subr.mxu0 0.0
    %751 = vmatpush1.msra.mxu0 %v712
    %752 = vmatprep.subr.mxu0 0.0
    %753 = vmatpush1.msra.mxu0 %v713
    %754 = vmatprep.subr.mxu0 0.0
    %755 = vmatpush1.msra.mxu0 0.0
    %756 = vmatprep.subr.mxu0 0.0
    %757 = vmatpush1.msra.mxu0 0.0
    %758 = vmatprep.subr.mxu0 0.0
    %759 = vmatpush1.msra.mxu0 0.0
    %760 = vmatprep.subr.mxu0 0.0
    %761 = vmatpush1.msra.mxu0 0.0
    %762 = vmatprep.subr.mxu0 0.0
    %763 = vmatpush1.msra.mxu0 0.0
    %764 = vmatprep.subr.mxu0 0.0
    %765 = vmatpush1.msra.mxu0 0.0
    %766 = vmatprep.subr.mxu0 0.0
    %767 = vmatpush1.msra.mxu0 0.0
    %768 = vmatprep.subr.mxu0 0.0
    %769 = vmatpush1.msra.mxu0 0.0
    %770 = vmatprep.subr.mxu0 0.0
    %771 = vmatpush1.msra.mxu0 0.0
    %772 = vmatprep.subr.mxu0 0.0
    %773 = vmatpush1.msra.mxu0 0.0
    %774 = vmatprep.subr.mxu0 0.0
    %775 = vmatpush1.msra.mxu0 0.0
    %776 = vmatprep.subr.mxu0 0.0
    %777 = vmatpush1.msra.mxu0 0.0
    %778 = vmatprep.subr.mxu0 0.0
    %779 = vmatpush1.msra.mxu0 0.0
    %780 = vmatprep.subr.mxu0 0.0
    %781 = vmatpush1.msra.mxu0 0.0
    %782 = vmatprep.subr.mxu0 0.0
    %783 = vmatpush1.msra.mxu0 0.0
    %784 = vmatprep.subr.mxu0 0.0
    %785 = vmatpush1.msra.mxu0 0.0
    %786 = vmatprep.mubr.f32.mxu0 0.0
    %787 = vmatmul.mubr.f32.gmra.mrb[0].mxu0 %v681
    %v788 = vpop.f32.mrb[0].mxu0
    %v789 = vadd.f32 %v720, %v788
    %v790 = vpop.f32.mrb[0].mxu0
    %791 = vmatprep.mubr.f32.mxu0 0.0
    %792 = vmatmul.mubr.f32.gmra.mrb[0].mxu0 %v682
    %v793 = vpop.f32.mrb[0].mxu0
    %v794 = vadd.f32 %v720, %v793
    %v795 = vpop.f32.mrb[0].mxu0
    %796 = vmatprep.mubr.f32.mxu0 0.0
    %797 = vmatmul.mubr.f32.gmra.mrb[0].mxu0 %v683
    %v798 = vpop.f32.mrb[0].mxu0
    %v799 = vadd.f32 %v720, %v798
    %v800 = vpop.f32.mrb[0].mxu0
    %801 = vmatprep.mubr.f32.mxu0 0.0
    %802 = vmatmul.mubr.f32.gmra.mrb[0].mxu0 %v684
    %v803 = vpop.f32.mrb[0].mxu0
    %v804 = vadd.f32 %v720, %v803
    %v805 = vpop.f32.mrb[0].mxu0
    %806 = vmatprep.mubr.f32.mxu0 0.0
    %807 = vmatmul.mubr.f32.gmra.mrb[0].mxu0 %v685
    %v808 = vpop.f32.mrb[0].mxu0
    %v809 = vadd.f32 %v720, %v808
    %v810 = vpop.f32.mrb[0].mxu0
    %811 = vmatprep.mubr.f32.mxu0 0.0
    %812 = vmatmul.mubr.f32.gmra.mrb[0].mxu0 %v686
    %v813 = vpop.f32.mrb[0].mxu0
    %v814 = vadd.f32 %v720, %v813
    %v815 = vpop.f32.mrb[0].mxu0
    %816 = vmatprep.mubr.f32.mxu0 0.0
    %817 = vmatmul.mubr.f32.gmra.mrb[0].mxu0 %v687
    %v818 = vpop.f32.mrb[0].mxu0
    %v819 = vadd.f32 %v720, %v818
    %v820 = vpop.f32.mrb[0].mxu0
    %821 = vmatprep.mubr.f32.mxu0 0.0
    %822 = vmatmul.mubr.f32.gmra.mrb[0].mxu0 %v688
    %v823 = vpop.f32.mrb[0].mxu0
    %v824 = vadd.f32 %v720, %v823
    %v825 = vpop.f32.mrb[0].mxu0
    %826 = vmatprep.mubr.f32.mxu0 0.0
    %827 = vmatmul.mubr.f32.gmra.mrb[0].mxu0 %v689
    %v828 = vpop.f32.mrb[0].mxu0
    %v829 = vadd.f32 %v720, %v828
    %v830 = vpop.f32.mrb[0].mxu0
    %831 = vmatprep.mubr.f32.mxu0 0.0
    %832 = vmatmul.mubr.f32.gmra.mrb[0].mxu0 %v690
    %v833 = vpop.f32.mrb[0].mxu0
    %v834 = vadd.f32 %v720, %v833
    %v835 = vpop.f32.mrb[0].mxu0
    %836 = vmatprep.mubr.f32.mxu0 0.0
    %837 = vmatmul.mubr.f32.gmra.mrb[0].mxu0 %v691
    %v838 = vpop.f32.mrb[0].mxu0
    %v839 = vadd.f32 %v720, %v838
    %v840 = vpop.f32.mrb[0].mxu0
    %841 = vmatprep.mubr.f32.mxu0 0.0
    %842 = vmatmul.mubr.f32.gmra.mrb[0].mxu0 %v692
    %v843 = vpop.f32.mrb[0].mxu0
    %v844 = vadd.f32 %v720, %v843
    %v845 = vpop.f32.mrb[0].mxu0
    %846 = vmatprep.mubr.f32.mxu0 0.0
    %847 = vmatmul.mubr.f32.gmra.mrb[0].mxu0 %v693
    %v848 = vpop.f32.mrb[0].mxu0
    %v849 = vadd.f32 %v720, %v848
    %v850 = vpop.f32.mrb[0].mxu0
    %851 = vmatprep.mubr.f32.mxu0 0.0
    %852 = vmatmul.mubr.f32.gmra.mrb[0].mxu0 %v694
    %v853 = vpop.f32.mrb[0].mxu0
    %v854 = vadd.f32 %v720, %v853
    %v855 = vpop.f32.mrb[0].mxu0
    %856 = vmatprep.mubr.f32.mxu0 0.0
    %857 = vmatmul.mubr.f32.gmra.mrb[0].mxu0 %v695
    %v858 = vpop.f32.mrb[0].mxu0
    %v859 = vadd.f32 %v720, %v858
    %v860 = vpop.f32.mrb[0].mxu0
    %861 = vmatprep.mubr.f32.mxu0 0.0
    %862 = vmatmul.mubr.f32.gmra.mrb[0].mxu0 %v696
    %v863 = vpop.f32.mrb[0].mxu0
    %v864 = vadd.f32 %v720, %v863
    %v865 = vpop.f32.mrb[0].mxu0
    %866 = vdwg.mxu0
    %v867 = vmax.f32 %v789, 0.0
    %v868 = vmax.f32 %v794, 0.0
    %v869 = vmax.f32 %v799, 0.0
    %v870 = vmax.f32 %v804, 0.0
    %v871 = vmax.f32 %v809, 0.0
    %v872 = vmax.f32 %v814, 0.0
    %v873 = vmax.f32 %v819, 0.0
    %v874 = vmax.f32 %v824, 0.0
    %v875 = vmax.f32 %v829, 0.0
    %v876 = vmax.f32 %v834, 0.0
    %v877 = vmax.f32 %v839, 0.0
    %v878 = vmax.f32 %v844, 0.0
    %v879 = vmax.f32 %v849, 0.0
    %v880 = vmax.f32 %v854, 0.0
    %v881 = vmax.f32 %v859, 0.0
    %v882 = vmax.f32 %v864, 0.0
    %v883 = vsub.f32 0.0, %v789
    %v884 = vsub.f32 0.0, %v794
    %v885 = vsub.f32 0.0, %v799
    %v886 = vsub.f32 0.0, %v804
    %v887 = vsub.f32 0.0, %v809
    %v888 = vsub.f32 0.0, %v814
    %v889 = vsub.f32 0.0, %v819
    %v890 = vsub.f32 0.0, %v824
    %v891 = vsub.f32 0.0, %v829
    %v892 = vsub.f32 0.0, %v834
    %v893 = vsub.f32 0.0, %v839
    %v894 = vsub.f32 0.0, %v844
    %v895 = vsub.f32 0.0, %v849
    %v896 = vsub.f32 0.0, %v854
    %v897 = vsub.f32 0.0, %v859
    %v898 = vsub.f32 0.0, %v864
    %vm899 = vcmp.ne.f32.partialorder %v883, %v883
    %vm900 = vcmp.ne.f32.partialorder %v884, %v884
    %vm901 = vcmp.ne.f32.partialorder %v885, %v885
    %vm902 = vcmp.ne.f32.partialorder %v886, %v886
    %vm903 = vcmp.ne.f32.partialorder %v887, %v887
    %vm904 = vcmp.ne.f32.partialorder %v888, %v888
    %vm905 = vcmp.ne.f32.partialorder %v889, %v889
    %vm906 = vcmp.ne.f32.partialorder %v890, %v890
    %vm907 = vcmp.ne.f32.partialorder %v891, %v891
    %vm908 = vcmp.ne.f32.partialorder %v892, %v892
    %vm909 = vcmp.ne.f32.partialorder %v893, %v893
    %vm910 = vcmp.ne.f32.partialorder %v894, %v894
    %vm911 = vcmp.ne.f32.partialorder %v895, %v895
    %vm912 = vcmp.ne.f32.partialorder %v896, %v896
    %vm913 = vcmp.ne.f32.partialorder %v897, %v897
    %vm914 = vcmp.ne.f32.partialorder %v898, %v898
    %v915 = vadd.f32 %v789, 0.0
    %v916 = vadd.f32 %v794, 0.0
    %v917 = vadd.f32 %v799, 0.0
    %v918 = vadd.f32 %v804, 0.0
    %v919 = vadd.f32 %v809, 0.0
    %v920 = vadd.f32 %v814, 0.0
    %v921 = vadd.f32 %v819, 0.0
    %v922 = vadd.f32 %v824, 0.0
    %v923 = vadd.f32 %v829, 0.0
    %v924 = vadd.f32 %v834, 0.0
    %v925 = vadd.f32 %v839, 0.0
    %v926 = vadd.f32 %v844, 0.0
    %v927 = vadd.f32 %v849, 0.0
    %v928 = vadd.f32 %v854, 0.0
    %v929 = vadd.f32 %v859, 0.0
    %v930 = vadd.f32 %v864, 0.0
    %v931 = vand.u32 2147483647, %v883
    %v932 = vand.u32 2147483647, %v884
    %v933 = vand.u32 2147483647, %v885
    %v934 = vand.u32 2147483647, %v886
    %v935 = vand.u32 2147483647, %v887
    %v936 = vand.u32 2147483647, %v888
    %v937 = vand.u32 2147483647, %v889
    %v938 = vand.u32 2147483647, %v890
    %v939 = vand.u32 2147483647, %v891
    %v940 = vand.u32 2147483647, %v892
    %v941 = vand.u32 2147483647, %v893
    %v942 = vand.u32 2147483647, %v894
    %v943 = vand.u32 2147483647, %v895
    %v944 = vand.u32 2147483647, %v896
    %v945 = vand.u32 2147483647, %v897
    %v946 = vand.u32 2147483647, %v898
    %v947 = vsub.f32 0.0, %v931
    %v948 = vsub.f32 0.0, %v932
    %v949 = vsub.f32 0.0, %v933
    %v950 = vsub.f32 0.0, %v934
    %v951 = vsub.f32 0.0, %v935
    %v952 = vsub.f32 0.0, %v936
    %v953 = vsub.f32 0.0, %v937
    %v954 = vsub.f32 0.0, %v938
    %v955 = vsub.f32 0.0, %v939
    %v956 = vsub.f32 0.0, %v940
    %v957 = vsub.f32 0.0, %v941
    %v958 = vsub.f32 0.0, %v942
    %v959 = vsub.f32 0.0, %v943
    %v960 = vsub.f32 0.0, %v944
    %v961 = vsub.f32 0.0, %v945
    %v962 = vsub.f32 0.0, %v946
    %v963 = vmul.f32 %v947, 1.442695
    %v964 = vpow.pop %v963
    %v965 = vmul.f32 %v948, 1.442695
    %v966 = vpow.pop %v965
    %v967 = vmul.f32 %v949, 1.442695
    %v968 = vpow.pop %v967
    %v969 = vmul.f32 %v950, 1.442695
    %v970 = vpow.pop %v969
    %v971 = vmul.f32 %v951, 1.442695
    %v972 = vpow.pop %v971
    %v973 = vmul.f32 %v952, 1.442695
    %v974 = vpow.pop %v973
    %v975 = vmul.f32 %v953, 1.442695
    %v976 = vpow.pop %v975
    %v977 = vmul.f32 %v954, 1.442695
    %v978 = vpow.pop %v977
    %v979 = vmul.f32 %v955, 1.442695
    %v980 = vpow.pop %v979
    %v981 = vmul.f32 %v956, 1.442695
    %v982 = vpow.pop %v981
    %v983 = vmul.f32 %v957, 1.442695
    %v984 = vpow.pop %v983
    %v985 = vmul.f32 %v958, 1.442695
    %v986 = vpow.pop %v985
    %v987 = vmul.f32 %v959, 1.442695
    %v988 = vpow.pop %v987
    %v989 = vmul.f32 %v960, 1.442695
    %v990 = vpow.pop %v989
    %v991 = vmul.f32 %v961, 1.442695
    %v992 = vpow.pop %v991
    %v993 = vmul.f32 %v962, 1.442695
    %v994 = vpow.pop %v993
    %v995 = vadd.f32 %v964, 1.0
    %v996 = vlog2.pop %v995
    %v997 = vmul.f32 %v996, 0.6931472
    %v998 = vmul.f32 -0.5, %v964
    %v999 = vadd.f32 %v998, 1.0
    %v1000 = vmul.f32 %v999, %v964
    %v1001 = vand.u32 2147483647, %v964
    %vm1002 = vcmp.lt.f32.partialorder %v1001, 0.0004427343
    %v1003 = vsel %vm1002, %v1000, %v997
    %v1004 = vadd.f32 %v966, 1.0
    %v1005 = vlog2.pop %v1004
    %v1006 = vmul.f32 %v1005, 0.6931472
    %v1007 = vmul.f32 -0.5, %v966
    %v1008 = vadd.f32 %v1007, 1.0
    %v1009 = vmul.f32 %v1008, %v966
    %v1010 = vand.u32 2147483647, %v966
    %vm1011 = vcmp.lt.f32.partialorder %v1010, 0.0004427343
    %v1012 = vsel %vm1011, %v1009, %v1006
    %v1013 = vadd.f32 %v968, 1.0
    %v1014 = vlog2.pop %v1013
    %v1015 = vmul.f32 %v1014, 0.6931472
    %v1016 = vmul.f32 -0.5, %v968
    %v1017 = vadd.f32 %v1016, 1.0
    %v1018 = vmul.f32 %v1017, %v968
    %v1019 = vand.u32 2147483647, %v968
    %vm1020 = vcmp.lt.f32.partialorder %v1019, 0.0004427343
    %v1021 = vsel %vm1020, %v1018, %v1015
    %v1022 = vadd.f32 %v970, 1.0
    %v1023 = vlog2.pop %v1022
    %v1024 = vmul.f32 %v1023, 0.6931472
    %v1025 = vmul.f32 -0.5, %v970
    %v1026 = vadd.f32 %v1025, 1.0
    %v1027 = vmul.f32 %v1026, %v970
    %v1028 = vand.u32 2147483647, %v970
    %vm1029 = vcmp.lt.f32.partialorder %v1028, 0.0004427343
    %v1030 = vsel %vm1029, %v1027, %v1024
    %v1031 = vadd.f32 %v972, 1.0
    %v1032 = vlog2.pop %v1031
    %v1033 = vmul.f32 %v1032, 0.6931472
    %v1034 = vmul.f32 -0.5, %v972
    %v1035 = vadd.f32 %v1034, 1.0
    %v1036 = vmul.f32 %v1035, %v972
    %v1037 = vand.u32 2147483647, %v972
    %vm1038 = vcmp.lt.f32.partialorder %v1037, 0.0004427343
    %v1039 = vsel %vm1038, %v1036, %v1033
    %v1040 = vadd.f32 %v974, 1.0
    %v1041 = vlog2.pop %v1040
    %v1042 = vmul.f32 %v1041, 0.6931472
    %v1043 = vmul.f32 -0.5, %v974
    %v1044 = vadd.f32 %v1043, 1.0
    %v1045 = vmul.f32 %v1044, %v974
    %v1046 = vand.u32 2147483647, %v974
    %vm1047 = vcmp.lt.f32.partialorder %v1046, 0.0004427343
    %v1048 = vsel %vm1047, %v1045, %v1042
    %v1049 = vadd.f32 %v976, 1.0
    %v1050 = vlog2.pop %v1049
    %v1051 = vmul.f32 %v1050, 0.6931472
    %v1052 = vmul.f32 -0.5, %v976
    %v1053 = vadd.f32 %v1052, 1.0
    %v1054 = vmul.f32 %v1053, %v976
    %v1055 = vand.u32 2147483647, %v976
    %vm1056 = vcmp.lt.f32.partialorder %v1055, 0.0004427343
    %v1057 = vsel %vm1056, %v1054, %v1051
    %v1058 = vadd.f32 %v978, 1.0
    %v1059 = vlog2.pop %v1058
    %v1060 = vmul.f32 %v1059, 0.6931472
    %v1061 = vmul.f32 -0.5, %v978
    %v1062 = vadd.f32 %v1061, 1.0
    %v1063 = vmul.f32 %v1062, %v978
    %v1064 = vand.u32 2147483647, %v978
    %vm1065 = vcmp.lt.f32.partialorder %v1064, 0.0004427343
    %v1066 = vsel %vm1065, %v1063, %v1060
    %v1067 = vadd.f32 %v980, 1.0
    %v1068 = vlog2.pop %v1067
    %v1069 = vmul.f32 %v1068, 0.6931472
    %v1070 = vmul.f32 -0.5, %v980
    %v1071 = vadd.f32 %v1070, 1.0
    %v1072 = vmul.f32 %v1071, %v980
    %v1073 = vand.u32 2147483647, %v980
    %vm1074 = vcmp.lt.f32.partialorder %v1073, 0.0004427343
    %v1075 = vsel %vm1074, %v1072, %v1069
    %v1076 = vadd.f32 %v982, 1.0
    %v1077 = vlog2.pop %v1076
    %v1078 = vmul.f32 %v1077, 0.6931472
    %v1079 = vmul.f32 -0.5, %v982
    %v1080 = vadd.f32 %v1079, 1.0
    %v1081 = vmul.f32 %v1080, %v982
    %v1082 = vand.u32 2147483647, %v982
    %vm1083 = vcmp.lt.f32.partialorder %v1082, 0.0004427343
    %v1084 = vsel %vm1083, %v1081, %v1078
    %v1085 = vadd.f32 %v984, 1.0
    %v1086 = vlog2.pop %v1085
    %v1087 = vmul.f32 %v1086, 0.6931472
    %v1088 = vmul.f32 -0.5, %v984
    %v1089 = vadd.f32 %v1088, 1.0
    %v1090 = vmul.f32 %v1089, %v984
    %v1091 = vand.u32 2147483647, %v984
    %vm1092 = vcmp.lt.f32.partialorder %v1091, 0.0004427343
    %v1093 = vsel %vm1092, %v1090, %v1087
    %v1094 = vadd.f32 %v986, 1.0
    %v1095 = vlog2.pop %v1094
    %v1096 = vmul.f32 %v1095, 0.6931472
    %v1097 = vmul.f32 -0.5, %v986
    %v1098 = vadd.f32 %v1097, 1.0
    %v1099 = vmul.f32 %v1098, %v986
    %v1100 = vand.u32 2147483647, %v986
    %vm1101 = vcmp.lt.f32.partialorder %v1100, 0.0004427343
    %v1102 = vsel %vm1101, %v1099, %v1096
    %v1103 = vadd.f32 %v988, 1.0
    %v1104 = vlog2.pop %v1103
    %v1105 = vmul.f32 %v1104, 0.6931472
    %v1106 = vmul.f32 -0.5, %v988
    %v1107 = vadd.f32 %v1106, 1.0
    %v1108 = vmul.f32 %v1107, %v988
    %v1109 = vand.u32 2147483647, %v988
    %vm1110 = vcmp.lt.f32.partialorder %v1109, 0.0004427343
    %v1111 = vsel %vm1110, %v1108, %v1105
    %v1112 = vadd.f32 %v990, 1.0
    %v1113 = vlog2.pop %v1112
    %v1114 = vmul.f32 %v1113, 0.6931472
    %v1115 = vmul.f32 -0.5, %v990
    %v1116 = vadd.f32 %v1115, 1.0
    %v1117 = vmul.f32 %v1116, %v990
    %v1118 = vand.u32 2147483647, %v990
    %vm1119 = vcmp.lt.f32.partialorder %v1118, 0.0004427343
    %v1120 = vsel %vm1119, %v1117, %v1114
    %v1121 = vadd.f32 %v992, 1.0
    %v1122 = vlog2.pop %v1121
    %v1123 = vmul.f32 %v1122, 0.6931472
    %v1124 = vmul.f32 -0.5, %v992
    %v1125 = vadd.f32 %v1124, 1.0
    %v1126 = vmul.f32 %v1125, %v992
    %v1127 = vand.u32 2147483647, %v992
    %vm1128 = vcmp.lt.f32.partialorder %v1127, 0.0004427343
    %v1129 = vsel %vm1128, %v1126, %v1123
    %v1130 = vadd.f32 %v994, 1.0
    %v1131 = vlog2.pop %v1130
    %v1132 = vmul.f32 %v1131, 0.6931472
    %v1133 = vmul.f32 -0.5, %v994
    %v1134 = vadd.f32 %v1133, 1.0
    %v1135 = vmul.f32 %v1134, %v994
    %v1136 = vand.u32 2147483647, %v994
    %vm1137 = vcmp.lt.f32.partialorder %v1136, 0.0004427343
    %v1138 = vsel %vm1137, %v1135, %v1132
    %v1139 = vadd.f32 %v867, %v1003
    %v1140 = vadd.f32 %v868, %v1012
    %v1141 = vadd.f32 %v869, %v1021
    %v1142 = vadd.f32 %v870, %v1030
    %v1143 = vadd.f32 %v871, %v1039
    %v1144 = vadd.f32 %v872, %v1048
    %v1145 = vadd.f32 %v873, %v1057
    %v1146 = vadd.f32 %v874, %v1066
    %v1147 = vadd.f32 %v875, %v1075
    %v1148 = vadd.f32 %v876, %v1084
    %v1149 = vadd.f32 %v877, %v1093
    %v1150 = vadd.f32 %v878, %v1102
    %v1151 = vadd.f32 %v879, %v1111
    %v1152 = vadd.f32 %v880, %v1120
    %v1153 = vadd.f32 %v881, %v1129
    %v1154 = vadd.f32 %v882, %v1138
    %v1155 = vsel %vm899, %v915, %v1139
    %v1156 = vsel %vm900, %v916, %v1140
    %v1157 = vsel %vm901, %v917, %v1141
    %v1158 = vsel %vm902, %v918, %v1142
    %v1159 = vsel %vm903, %v919, %v1143
    %v1160 = vsel %vm904, %v920, %v1144
    %v1161 = vsel %vm905, %v921, %v1145
    %v1162 = vsel %vm906, %v922, %v1146
    %v1163 = vsel %vm907, %v923, %v1147
    %v1164 = vsel %vm908, %v924, %v1148
    %v1165 = vsel %vm909, %v925, %v1149
    %v1166 = vsel %vm910, %v926, %v1150
    %v1167 = vsel %vm911, %v927, %v1151
    %v1168 = vsel %vm912, %v928, %v1152
    %v1169 = vsel %vm913, %v929, %v1153
    %v1170 = vsel %vm914, %v930, %v1154
    %vm1171 = vcmask 7168
    %1172 = vst.msk [vmem:[#allocation6] sm:$0xff] %vm1171, %v1155
    %1173 = vst.msk [vmem:[#allocation6 + $0x8] sm:$0xff] %vm1171, %v1156
    %1174 = vst.msk [vmem:[#allocation6 + $0x10] sm:$0xff] %vm1171, %v1157
    %1175 = vst.msk [vmem:[#allocation6 + $0x18] sm:$0xff] %vm1171, %v1158
    %1176 = vst.msk [vmem:[#allocation6 + $0x20] sm:$0xff] %vm1171, %v1159
    %1177 = vst.msk [vmem:[#allocation6 + $0x28] sm:$0xff] %vm1171, %v1160
    %1178 = vst.msk [vmem:[#allocation6 + $0x30] sm:$0xff] %vm1171, %v1161
    %1179 = vst.msk [vmem:[#allocation6 + $0x38] sm:$0xff] %vm1171, %v1162
    %1180 = vst.msk [vmem:[#allocation6 + $0x40] sm:$0xff] %vm1171, %v1163
    %1181 = vst.msk [vmem:[#allocation6 + $0x48] sm:$0xff] %vm1171, %v1164
    %1182 = vst.msk [vmem:[#allocation6 + $0x50] sm:$0xff] %vm1171, %v1165
    %1183 = vst.msk [vmem:[#allocation6 + $0x58] sm:$0xff] %vm1171, %v1166
    %1184 = vst.msk [vmem:[#allocation6 + $0x60] sm:$0xff] %vm1171, %v1167
    %1185 = vst.msk [vmem:[#allocation6 + $0x68] sm:$0xff] %vm1171, %v1168
    %1186 = vst.msk [vmem:[#allocation6 + $0x70] sm:$0xff] %vm1171, %v1169
    %1187 = vst.msk [vmem:[#allocation6 + $0x78] sm:$0xff] %vm1171, %v1170
    // Predicated region
    $region22: #{tpu_custom_call.1} parent=1 // pred_check
      _
    $region23: #{tpu_custom_call.1} parent=1 // pred_check_branch
      %1189 = sbr.rel (0) target = $region25
    $region24: #{tpu_custom_call.1} parent=1 // pred_region
      // Predicated region
      $region26: #{tpu_custom_call.1} parent=24 // pred_check
        _
      $region27: #{tpu_custom_call.1} parent=24 // pred_check_branch
        %1191 = sbr.rel (0) target = $region29
      $region28: #{tpu_custom_call.1} parent=24 // pred_region
        // Predicated region
        $region30: #{tpu_custom_call.1} parent=28 // pred_check
          _
        $region31: #{tpu_custom_call.1} parent=28 // pred_check_branch
          %1193 = sbr.rel (0) target = $region33
        $region32: #{tpu_custom_call.1} parent=28 // pred_region
          // Predicated region
          $region45: #{tpu_custom_call.1} parent=32 // pred_check
            _
          $region46: #{tpu_custom_call.1} parent=32 // pred_check_branch
            %1208 = sbr.rel (0) target = $region48
          $region47: #{tpu_custom_call.1} parent=32 // pred_region
            loop: start=0, step=1, limit=1
            $region49: #{tpu_custom_call.1} parent=47 // loop_pre_header
              _
            $region50: #{tpu_custom_call.1} parent=47 // loop_header
              %s1210 = sphi 0, %s1214
              %p1211 = scmp.ge.s32.totalorder %s1210, 1
              %s1215 = sphi [#allocation6], [#allocation6]
              %s1216 = sphi %s3, %s3
            $region51: #{tpu_custom_call.1} parent=47 // loop_header_branch
              %1213 = sbr.rel (%p1211) target = $region55
            $region52: #{tpu_custom_call.1} parent=47 // loop_body
              %v1217 = vld [vmem:[%s1215] sm:$0xff]
              %1218 = vst [vmem:[%s1216] sm:$0xff] %v1217
            $region53: #{tpu_custom_call.1} parent=47 // loop_footer
              %s1214 = sadd.s32 1, %s1210
            $region54: #{tpu_custom_call.1} parent=47 // loop_footer_branch
              %1209 = sbr.rel target = $region50
            $region55: #{tpu_custom_call.1} parent=47 // loop_exit
              _
          $region48: #{tpu_custom_call.1} parent=32 // pred_fallthru
            _
          // Predicated region
          $region56: #{tpu_custom_call.1} parent=32 // pred_check
            _
          $region57: #{tpu_custom_call.1} parent=32 // pred_check_branch
            %1220 = sbr.rel target = $region59
          $region58: #{tpu_custom_call.1} parent=32 // pred_region
            _
          $region59: #{tpu_custom_call.1} parent=32 // pred_fallthru
            _
        $region33: #{tpu_custom_call.1} parent=28 // pred_fallthru
          _
        // Predicated region
        $region34: #{tpu_custom_call.1} parent=28 // pred_check
          _
        $region35: #{tpu_custom_call.1} parent=28 // pred_check_branch
          %1195 = sbr.rel target = $region37
        $region36: #{tpu_custom_call.1} parent=28 // pred_region
          loop: start=0, step=1, limit=1
          $region38: #{tpu_custom_call.1} parent=36 // loop_pre_header
            _
          $region39: #{tpu_custom_call.1} parent=36 // loop_header
            %s1198 = sphi 0, %s1202
            %p1199 = scmp.ge.s32.totalorder %s1198, 1
            %s1203 = sphi [#allocation6], [#allocation6]
            %s1204 = sphi %s3, %s3
          $region40: #{tpu_custom_call.1} parent=36 // loop_header_branch
            %1201 = sbr.rel (%p1199) target = $region44
          $region41: #{tpu_custom_call.1} parent=36 // loop_body
            %v1205 = vld [vmem:[%s1203] sm:$0xff]
            %1206 = vst [vmem:[%s1204] sm:$0xff] %v1205
          $region42: #{tpu_custom_call.1} parent=36 // loop_footer
            %s1202 = sadd.s32 1, %s1198
          $region43: #{tpu_custom_call.1} parent=36 // loop_footer_branch
            %1197 = sbr.rel target = $region39
          $region44: #{tpu_custom_call.1} parent=36 // loop_exit
            _
        $region37: #{tpu_custom_call.1} parent=28 // pred_fallthru
          _
      $region29: #{tpu_custom_call.1} parent=24 // pred_fallthru
        _
      %1221 = vnop
    $region25: #{tpu_custom_call.1} parent=1 // pred_fallthru
      _
    // Predicated region
    $region60: #{tpu_custom_call.1} parent=1 // pred_check
      _
    $region61: #{tpu_custom_call.1} parent=1 // pred_check_branch
      %1223 = sbr.rel (0) target = $region63
    $region62: #{tpu_custom_call.1} parent=1 // pred_region
      _
    $region63: #{tpu_custom_call.1} parent=1 // pred_fallthru
      _
    %1224 = vsyncpa [#allocation3], 1
    %1225 = vsyncpa [#allocation5], 1

</llo_original>
